<compile_context>
chip_gen: v6e
topology: v6e:2x2x1
jax: 0.10.0
libtpu: 0.0.40
codegen_flags: <defaults>
</compile_context>

<pallas_src>
import jax
import jax.numpy as jnp
from jax.experimental import pallas as pl
from jax.experimental.pallas import tpu as pltpu


LANE = 128  # TPU lane width; feature dims are zero-padded up to this


def _round_up(x, m):
    return (x + m - 1) // m * m


def _vmem_limit_bytes():
    """Generation-aware scoped-VMEM limit: ~3/4 of physical VMEM."""
    try:
        info = pltpu.get_tpu_info()
        cap = (getattr(info, "vmem_capacity_bytes", None)
               or getattr(info, "vmem_size_bytes", None))
        if cap:
            return int(min(cap * 3 // 4, 112 * 1024 * 1024))
    except Exception:
        pass
    return 48 * 1024 * 1024  # safe floor on every generation (v7x has 64 MiB)


# ----------------------------- Pallas kernel ------------------------------ #

def fused_gcn_kernel(a_ref, x_ref, w1_ref, b1_ref, w2_ref, b2_ref, o_ref,
                     h_ref):
    """Two-phase fused 2-layer GCN.  Grid = (phase, row_tile).

    phase 0: h_ref[rows(i)] = relu((A_tile @ X) @ W1 + b1)   (bf16 scratch)
    phase 1: o_ref          = (A_tile @ H) @ W2 + b2

    Each phase's expensive matmul contracts the padded node dim N_p of the
    (TM, N_p) A row tile against a 128-wide operand; the follow-up
    (TM, 128) x (128, 128) matmul is negligible.  f32 accumulation throughout.
    """
    phase = pl.program_id(0)
    i = pl.program_id(1)
    tm = a_ref.shape[0]

    @pl.when(phase == 0)
    def _layer1():
        ax = jnp.dot(a_ref[...], x_ref[...],
                     preferred_element_type=jnp.float32)            # (TM, Fin_p)
        h = jnp.dot(ax.astype(jnp.bfloat16), w1_ref[...],
                    preferred_element_type=jnp.float32)             # (TM, Fh_p)
        h = jnp.maximum(h + b1_ref[...], 0.0)                       # bias + ReLU
        row0 = pl.multiple_of(i * tm, tm)
        h_ref[pl.ds(row0, tm), :] = h.astype(jnp.bfloat16)

    @pl.when(phase == 1)
    def _layer2():
        ah = jnp.dot(a_ref[...], h_ref[...],
                     preferred_element_type=jnp.float32)            # (TM, Fh_p)
        out = jnp.dot(ah.astype(jnp.bfloat16), w2_ref[...],
                      preferred_element_type=jnp.float32)           # (TM, Fo_p)
        o_ref[...] = (out + b2_ref[...]).astype(o_ref.dtype)


# ------------------------------ Wrapper ------------------------------------ #

def gcn_forward(x, a_hat, params, *, in_ch, hidden_ch, out_ch):
    """Fused forward of the 2-layer GCN.

    x      : [N, in_ch] float32 node features (logical / unpadded).
    a_hat  : [N_p, N_p] GCN-normalized adjacency, ALREADY bf16 and zero-padded
             (see build_normalized_adjacency), so the forward path never runs
             a separate HBM pass over the N^2 array.
    Returns [N, out_ch] float32.

    TODO(synk): F.dropout(p=0.5) is stochastic only when training=True;
    inference semantics (identity) are implemented here.
    """
    w1, b1, w2, b2 = params
    n = x.shape[0]
    n_p = a_hat.shape[0]
    assert a_hat.shape == (n_p, n_p) and n_p >= n and n_p % 8 == 0

    if a_hat.dtype != jnp.bfloat16:
        # Fallback only: prefer building A_hat in bf16 upstream -- this cast is
        # an extra full HBM pass over the kernel's largest operand.
        a_hat = a_hat.astype(jnp.bfloat16)

    fin_p = _round_up(in_ch, LANE)
    fh_p = _round_up(hidden_ch, LANE)
    fo_p = _round_up(out_ch, LANE)

    # Row-tile size: largest of {256, 128} dividing N_p (else a single tile).
    if n_p % 256 == 0 and n_p >= 512:
        tm = 256
    elif n_p % 128 == 0:
        tm = 128
    else:
        tm = n_p
    n_tiles = n_p // tm

    # Zero-pad the small operands (O(N*128) work, vs O(N^2) for A).  Padding is
    # exact: padded X rows/cols and padded W rows contribute 0, padded W cols +
    # zero bias give relu(0)=0 hidden cols, and padded output rows/cols are
    # sliced off below.
    x_p = jnp.zeros((n_p, fin_p), jnp.bfloat16).at[:n, :in_ch].set(
        x.astype(jnp.bfloat16))
    w1_p = jnp.zeros((fin_p, fh_p), jnp.bfloat16).at[:in_ch, :hidden_ch].set(
        w1.astype(jnp.bfloat16))
    b1_p = jnp.zeros((1, fh_p), jnp.float32).at[:, :hidden_ch].set(
        jnp.reshape(b1, (1, hidden_ch)))
    w2_p = jnp.zeros((fh_p, fo_p), jnp.bfloat16).at[:hidden_ch, :out_ch].set(
        w2.astype(jnp.bfloat16))
    b2_p = jnp.zeros((1, fo_p), jnp.float32).at[:, :out_ch].set(
        jnp.reshape(b2, (1, out_ch)))

    # Advisory cost hint (padded dims; the two streamed passes over A dominate
    # memory traffic).
    flops = (2 * n_p * n_p * fin_p + 2 * n_p * fin_p * fh_p
             + 2 * n_p * n_p * fh_p + 2 * n_p * fh_p * fo_p)
    bytes_accessed = (2 * a_hat.size * 2 + x_p.size * 2 + w1_p.size * 2
                      + w2_p.size * 2 + b1_p.size * 4 + b2_p.size * 4
                      + n_p * fo_p * 2)
    cost = pl.CostEstimate(flops=flops, transcendentals=0,
                           bytes_accessed=bytes_accessed)

    grid = (2, n_tiles)  # (phase, row tile); phase 1 needs ALL of phase 0's H
    out_p = pl.pallas_call(
        fused_gcn_kernel,
        out_shape=jax.ShapeDtypeStruct((n_p, fo_p), jnp.bfloat16),
        grid=grid,
        in_specs=[
            # A_hat row tiles stream through VMEM (pipelined DMA, default
            # double buffering); all other operands are resident (constant
            # index maps -> DMA'd exactly once).
            pl.BlockSpec((tm, n_p), lambda p, i: (i, 0)),
            pl.BlockSpec((n_p, fin_p), lambda p, i: (0, 0)),
            pl.BlockSpec((fin_p, fh_p), lambda p, i: (0, 0)),
            pl.BlockSpec((1, fh_p), lambda p, i: (0, 0)),
            pl.BlockSpec((fh_p, fo_p), lambda p, i: (0, 0)),
            pl.BlockSpec((1, fo_p), lambda p, i: (0, 0)),
        ],
        # Output tiles are only produced in phase 1; routing phase 0 to block 0
        # (i * p == 0 there) keeps that block resident through phase 0, so no
        # uninitialized data is ever written back to HBM.
        out_specs=pl.BlockSpec((tm, fo_p), lambda p, i: (i * p, 0)),
        scratch_shapes=[pltpu.VMEM((n_p, fh_p), jnp.bfloat16)],  # persistent H
        cost_estimate=cost,
        compiler_params=pltpu.CompilerParams(
            # Row axis must stay "arbitrary": phase 1 of every row tile reads
            # the whole per-core H scratch, so megacore row sharding would be
            # incorrect.  (For 2-TC v7x parallelism, split per layer instead.)
            dimension_semantics=("arbitrary", "arbitrary"),
            vmem_limit_bytes=_vmem_limit_bytes(),
        ),
    )(a_hat, x_p, w1_p, b1_p, w2_p, b2_p)

    # Strip node/lane padding; return logical f32 logits like the reference.
    return out_p[:n, :out_ch].astype(jnp.float32)


# ------------------------------ Plain-JAX glue ----------------------------- #

def build_normalized_adjacency(edge_index, edge_weight, num_nodes, *,
                               pad_to=None, dtype=jnp.bfloat16):
    """Dense GCN-normalized adjacency  D^-1/2 (A + I) D^-1/2  with
    A[dst, src] = edge_weight (PyG message-passing convention).

    Emitted directly in the kernel dtype (bf16) and zero-padded to `pad_to`
    nodes, so the per-forward path never re-reads/re-writes the N^2 array
    (graph preprocessing, amortized over forward calls)."""
    src = edge_index[0]
    dst = edge_index[1]
    if edge_weight is None:
        edge_weight = jnp.ones((edge_index.shape[1],), dtype=jnp.float32)
    a = jnp.zeros((num_nodes, num_nodes), dtype=jnp.float32)
    a = a.at[dst, src].add(edge_weight)
    a = a + jnp.eye(num_nodes, dtype=jnp.float32)  # add_self_loops=True
    deg = jnp.sum(a, axis=1)
    dinv_sqrt = jnp.where(deg > 0, 1.0 / jnp.sqrt(deg), 0.0)
    a_hat = (dinv_sqrt[:, None] * a * dinv_sqrt[None, :]).astype(dtype)
    if pad_to is not None and pad_to > num_nodes:
        a_hat = jnp.zeros((pad_to, pad_to), dtype).at[
            :num_nodes, :num_nodes].set(a_hat)
    return a_hat


def glorot(key, fan_in, fan_out):
    limit = jnp.sqrt(6.0 / (fan_in + fan_out))
    return jax.random.uniform(
        key, (fan_in, fan_out), minval=-limit, maxval=limit, dtype=jnp.float32
    )


# ---------------------------------- Main ----------------------------------- #

if __name__ == "__main__":
    N = 128           # number of graph nodes
    IN_CH = 16
    HIDDEN_CH = 64    # matches hidden_channels = 64 in the reference module
    OUT_CH = 8

    key = jax.random.PRNGKey(0)
    k_x, k_w1, k_w2 = jax.random.split(key, 3)

    # Node features
    x = jax.random.normal(k_x, (N, IN_CH), dtype=jnp.float32)

    # Deterministic ring graph (bidirectional edges), edge_index: [2, E]
    idx = jnp.arange(N, dtype=jnp.int32)
    nxt = jnp.roll(idx, -1)
    edge_index = jnp.stack(
        [jnp.concatenate([idx, nxt]), jnp.concatenate([nxt, idx])], axis=0
    )

    # Normalized adjacency built once, in bf16, padded to the row-tile grid.
    n_pad = _round_up(N, LANE)
    a_hat = build_normalized_adjacency(edge_index, None, N,
                                       pad_to=n_pad, dtype=jnp.bfloat16)

    # GCNConv parameters (glorot weights, zero bias), deterministic
    w1 = glorot(k_w1, IN_CH, HIDDEN_CH)
    b1 = jnp.zeros((1, HIDDEN_CH), dtype=jnp.float32)
    w2 = glorot(k_w2, HIDDEN_CH, OUT_CH)
    b2 = jnp.zeros((1, OUT_CH), dtype=jnp.float32)

    out = gcn_forward(
        x, a_hat, (w1, b1, w2, b2),
        in_ch=IN_CH, hidden_ch=HIDDEN_CH, out_ch=OUT_CH,
    )
    out = jax.block_until_ready(out)
    assert out.shape == (N, OUT_CH) and out.dtype == jnp.float32

    # Pure-JAX float32 reference; tolerance accounts for bf16 rounding of
    # A / X / W and of the intermediate activations.
    a_f32 = build_normalized_adjacency(edge_index, None, N, dtype=jnp.float32)
    h_ref = jnp.maximum(a_f32 @ (x @ w1) + b1, 0.0)
    ref = a_f32 @ (h_ref @ w2) + b2
    assert float(jnp.max(jnp.abs(out - ref))) < 1e-1

    print("KERNEL_OK")
</pallas_src>

<mosaic_0001>
module attributes {stable_mosaic.version = 11 : i64} {
  func.func @fused_gcn_kernel(%arg0: i32, %arg1: i32, %arg2: memref<128x128xbf16, #tpu.memory_space<vmem>>, %arg3: memref<128x128xbf16, #tpu.memory_space<vmem>>, %arg4: memref<128x128xbf16, #tpu.memory_space<vmem>>, %arg5: memref<1x128xf32, #tpu.memory_space<vmem>>, %arg6: memref<128x128xbf16, #tpu.memory_space<vmem>>, %arg7: memref<1x128xf32, #tpu.memory_space<vmem>>, %arg8: memref<128x128xbf16, #tpu.memory_space<vmem>>, %arg9: memref<128x128xbf16, #tpu.memory_space<vmem>>) attributes {dimension_semantics = [#tpu.dimension_semantics<arbitrary>, #tpu.dimension_semantics<arbitrary>], iteration_bounds = array<i64: 2, 1>, scalar_prefetch = 0 : i64, scratch_operands = 1 : i64, tpu.core_type = #tpu.core_type<tc>, window_params = [{transform_indices = @transform_0, window_bounds = array<i64: 128, 128>}, {pipeline_mode = #tpu.pipeline_mode<synchronous>, transform_indices = @transform_1, window_bounds = array<i64: 128, 128>}, {pipeline_mode = #tpu.pipeline_mode<synchronous>, transform_indices = @transform_2, window_bounds = array<i64: 128, 128>}, {pipeline_mode = #tpu.pipeline_mode<synchronous>, transform_indices = @transform_3, window_bounds = array<i64: 1, 128>}, {pipeline_mode = #tpu.pipeline_mode<synchronous>, transform_indices = @transform_4, window_bounds = array<i64: 128, 128>}, {pipeline_mode = #tpu.pipeline_mode<synchronous>, transform_indices = @transform_5, window_bounds = array<i64: 1, 128>}, {transform_indices = @transform_6, window_bounds = array<i64: 128, 128>}]} {
    %c0_i32 = arith.constant 0 : i32
    %0 = arith.cmpi eq, %arg0, %c0_i32 : i32
    %1 = arith.extui %0 : i1 to i32
    %c0_i32_0 = arith.constant 0 : i32
    %2 = arith.cmpi ne, %1, %c0_i32_0 : i32
    scf.if %2 {
      %c0 = arith.constant 0 : index
      %c0_2 = arith.constant 0 : index
      %6 = vector.load %arg2[%c0, %c0_2] : memref<128x128xbf16, #tpu.memory_space<vmem>>, vector<128x128xbf16>
      %c0_3 = arith.constant 0 : index
      %c0_4 = arith.constant 0 : index
      %7 = vector.load %arg3[%c0_3, %c0_4] : memref<128x128xbf16, #tpu.memory_space<vmem>>, vector<128x128xbf16>
      %cst = arith.constant dense<0.000000e+00> : vector<128x128xf32>
      %8 = tpu.matmul %6, %7, %cst {dimension_numbers = #tpu.dot_dimension_numbers<[1], [0], [0], [1], [0, 0, 1, 1], [], []>} : vector<128x128xbf16>, vector<128x128xbf16>, vector<128x128xf32> -> vector<128x128xf32>
      %9 = arith.truncf %8 : vector<128x128xf32> to vector<128x128xbf16>
      %c0_5 = arith.constant 0 : index
      %c0_6 = arith.constant 0 : index
      %10 = vector.load %arg4[%c0_5, %c0_6] : memref<128x128xbf16, #tpu.memory_space<vmem>>, vector<128x128xbf16>
      %cst_7 = arith.constant dense<0.000000e+00> : vector<128x128xf32>
      %11 = tpu.matmul %9, %10, %cst_7 {dimension_numbers = #tpu.dot_dimension_numbers<[1], [0], [0], [1], [0, 0, 1, 1], [], []>} : vector<128x128xbf16>, vector<128x128xbf16>, vector<128x128xf32> -> vector<128x128xf32>
      %c0_8 = arith.constant 0 : index
      %c0_9 = arith.constant 0 : index
      %12 = vector.load %arg5[%c0_8, %c0_9] : memref<1x128xf32, #tpu.memory_space<vmem>>, vector<1x128xf32>
      %13 = vector.broadcast %12 : vector<1x128xf32> to vector<128x128xf32>
      %14 = arith.addf %11, %13 : vector<128x128xf32>
      %cst_10 = arith.constant 0.000000e+00 : f32
      %15 = vector.broadcast %cst_10 : f32 to vector<128x128xf32>
      %16 = arith.maximumf %14, %15 : vector<128x128xf32>
      %c128_i32 = arith.constant 128 : i32
      %17 = arith.muli %arg1, %c128_i32 : i32
      %18 = tpu.assume_multiple %17, 128 : i32
      %19 = arith.truncf %16 : vector<128x128xf32> to vector<128x128xbf16>
      %20 = arith.index_cast %18 : i32 to index
      %c0_11 = arith.constant 0 : index
      %21 = vector.load %arg9[%20, %c0_11] : memref<128x128xbf16, #tpu.memory_space<vmem>>, vector<128x128xbf16>
      tpu.vector_store %arg9[%20, %c0_11], %19 {strides = array<i32>} : memref<128x128xbf16, #tpu.memory_space<vmem>>, vector<128x128xbf16>,
    } else {
    }
    %c1_i32 = arith.constant 1 : i32
    %3 = arith.cmpi eq, %arg0, %c1_i32 : i32
    %4 = arith.extui %3 : i1 to i32
    %c0_i32_1 = arith.constant 0 : i32
    %5 = arith.cmpi ne, %4, %c0_i32_1 : i32
    scf.if %5 {
      %c0 = arith.constant 0 : index
      %c0_2 = arith.constant 0 : index
      %6 = vector.load %arg2[%c0, %c0_2] : memref<128x128xbf16, #tpu.memory_space<vmem>>, vector<128x128xbf16>
      %c0_3 = arith.constant 0 : index
      %c0_4 = arith.constant 0 : index
      %7 = vector.load %arg9[%c0_3, %c0_4] : memref<128x128xbf16, #tpu.memory_space<vmem>>, vector<128x128xbf16>
      %cst = arith.constant dense<0.000000e+00> : vector<128x128xf32>
      %8 = tpu.matmul %6, %7, %cst {dimension_numbers = #tpu.dot_dimension_numbers<[1], [0], [0], [1], [0, 0, 1, 1], [], []>} : vector<128x128xbf16>, vector<128x128xbf16>, vector<128x128xf32> -> vector<128x128xf32>
      %9 = arith.truncf %8 : vector<128x128xf32> to vector<128x128xbf16>
      %c0_5 = arith.constant 0 : index
      %c0_6 = arith.constant 0 : index
      %10 = vector.load %arg6[%c0_5, %c0_6] : memref<128x128xbf16, #tpu.memory_space<vmem>>, vector<128x128xbf16>
      %cst_7 = arith.constant dense<0.000000e+00> : vector<128x128xf32>
      %11 = tpu.matmul %9, %10, %cst_7 {dimension_numbers = #tpu.dot_dimension_numbers<[1], [0], [0], [1], [0, 0, 1, 1], [], []>} : vector<128x128xbf16>, vector<128x128xbf16>, vector<128x128xf32> -> vector<128x128xf32>
      %c0_8 = arith.constant 0 : index
      %c0_9 = arith.constant 0 : index
      %12 = vector.load %arg7[%c0_8, %c0_9] : memref<1x128xf32, #tpu.memory_space<vmem>>, vector<1x128xf32>
      %13 = vector.broadcast %12 : vector<1x128xf32> to vector<128x128xf32>
      %14 = arith.addf %11, %13 : vector<128x128xf32>
      %15 = arith.truncf %14 : vector<128x128xf32> to vector<128x128xbf16>
      %c0_10 = arith.constant 0 : index
      %c0_11 = arith.constant 0 : index
      %16 = vector.load %arg8[%c0_10, %c0_11] : memref<128x128xbf16, #tpu.memory_space<vmem>>, vector<128x128xbf16>
      tpu.vector_store %arg8[%c0_10, %c0_11], %15 {strides = array<i32>} : memref<128x128xbf16, #tpu.memory_space<vmem>>, vector<128x128xbf16>,
    } else {
    }
    return
  }
  func.func @transform_0(%arg0: i32, %arg1: i32) -> (i32, i32) {
    %c0_i32 = arith.constant 0 : i32
    %c0_i32_0 = arith.constant 0 : i32
    return %arg1, %c0_i32 : i32, i32
  }
  func.func @transform_1(%arg0: i32, %arg1: i32) -> (i32, i32) {
    %c0_i32 = arith.constant 0 : i32
    %c0_i32_0 = arith.constant 0 : i32
    %c0_i32_1 = arith.constant 0 : i32
    return %c0_i32, %c0_i32_0 : i32, i32
  }
  func.func @transform_2(%arg0: i32, %arg1: i32) -> (i32, i32) {
    %c0_i32 = arith.constant 0 : i32
    %c0_i32_0 = arith.constant 0 : i32
    %c0_i32_1 = arith.constant 0 : i32
    return %c0_i32, %c0_i32_0 : i32, i32
  }
  func.func @transform_3(%arg0: i32, %arg1: i32) -> (i32, i32) {
    %c0_i32 = arith.constant 0 : i32
    %c0_i32_0 = arith.constant 0 : i32
    %c0_i32_1 = arith.constant 0 : i32
    return %c0_i32, %c0_i32_0 : i32, i32
  }
  func.func @transform_4(%arg0: i32, %arg1: i32) -> (i32, i32) {
    %c0_i32 = arith.constant 0 : i32
    %c0_i32_0 = arith.constant 0 : i32
    %c0_i32_1 = arith.constant 0 : i32
    return %c0_i32, %c0_i32_0 : i32, i32
  }
  func.func @transform_5(%arg0: i32, %arg1: i32) -> (i32, i32) {
    %c0_i32 = arith.constant 0 : i32
    %c0_i32_0 = arith.constant 0 : i32
    %c0_i32_1 = arith.constant 0 : i32
    return %c0_i32, %c0_i32_0 : i32, i32
  }
  func.func @transform_6(%arg0: i32, %arg1: i32) -> (i32, i32) {
    %0 = arith.muli %arg1, %arg0 : i32
    %c0_i32 = arith.constant 0 : i32
    %c0_i32_0 = arith.constant 0 : i32
    return %0, %c0_i32 : i32, i32
  }
}

</mosaic_0001>

<llo_original>
// kernel: tpu_custom_call.1
$region0: #{tpu_custom_call.1}
  #allocation0 [shape = 'u32[]', space=smem, size = 0x4, offset = 0x4, fixed_abs, tag = 'smem constant byte address 0x4 - core index']
  #allocation1 [shape = 'u32[144,128]{1,0:T(1,128)}', space=vmem, size = 0x12000, scoped, tag = 'internal scratch']
  #allocation2 [shape = 'bf16[128,128]{1,0:T(8,128)(2,1)}', space=vmem, size = 0x8000, scoped, tag = 'scratch operand']
  %s0 = inlined_call_operand.hbm [shape: bf16[128,128], index: 0, kind: input, shape index: {}]
  %s1 = inlined_call_operand.hbm [shape: bf16[128,128], index: 1, kind: input, shape index: {}]
  %s2 = inlined_call_operand.hbm [shape: bf16[128,128], index: 2, kind: input, shape index: {}]
  %s3 = inlined_call_operand.vmem [shape: f32[1,128], index: 3, kind: input, shape index: {}]
  %s4 = inlined_call_operand.hbm [shape: bf16[128,128], index: 4, kind: input, shape index: {}]
  %s5 = inlined_call_operand.vmem [shape: f32[1,128], index: 5, kind: input, shape index: {}]
  %s6 = inlined_call_operand.hbm [shape: bf16[128,128], index: 6, kind: output, shape index: {}]
  %s7 = sld [smem:[#allocation0]]
  $region81: #{tpu_custom_call.1} parent=0
    _
  %s9 = ssub.s32 1, %s7
  %s10 = scalar_select 0, %s9, %s7
  $region1: #{tpu_custom_call.1} parent=0
    #allocation3 [shape = 'u8[32768]{0}', space=vmem, size = 0x8000, scoped, tag = 'input window, operand 0, single buffered']
    #allocation4 [shape = 's32[2]{0}', space=sflag, size = 0x8, scoped, tag = 'scoped memory for tpu_custom_call.1']
    #allocation5 [shape = 's32[2]{0}', space=sflag, size = 0x8, scoped, tag = 'scoped memory for tpu_custom_call.1']
    #allocation6 [shape = 'u8[32768]{0}', space=vmem, size = 0x8000, scoped, tag = 'input window, operand 1, single buffered']
    #allocation7 [shape = 's32[1]{0}', space=sflag, size = 0x4, scoped, tag = 'scoped memory for tpu_custom_call.1']
    #allocation8 [shape = 'u8[32768]{0}', space=vmem, size = 0x8000, scoped, tag = 'input window, operand 2, single buffered']
    #allocation9 [shape = 'u8[32768]{0}', space=vmem, size = 0x8000, scoped, tag = 'input window, operand 4, single buffered']
    #allocation10 [shape = 's32[1]{0}', space=sflag, size = 0x4, scoped, tag = 'scoped memory for tpu_custom_call.1']
    #allocation11 [shape = 'u8[65536]{0}', space=vmem, size = 0x10000, scoped, tag = 'output window, operand 0']
    %11 = vsyncpa [#allocation4], 0
    %12 = vsyncpa [#allocation7], 0
    %13 = vsyncpa [#allocation10], 0
    %14 = vsyncpa [#allocation5], 0
    %s15 = scalar_lea.sflag [#allocation5], 1
    %16 = vsyncpa %s15, 0
    loop: start=0, step=1, limit=4
    $region2: #{tpu_custom_call.1} parent=1 // loop_pre_header
      _
    $region3: #{tpu_custom_call.1} parent=1 // loop_header
      %s18 = sphi 0, %s22
      %p19 = scmp.ge.s32.totalorder %s18, 4
      %s25 = sphi 0, %s37
      %s26 = sphi 0, %s33
      %s27 = sphi 0, %s25
      %s28 = sphi 0, %s26
      %s29 = sphi 0, %s27
      %s30 = sphi 0, %s28
      %s40 = sphi 0, %s42
      %s43 = sphi 0, %s40
      %s44 = sphi 0, %s43
      %s60 = sphi 0, %s44
      %s64 = sphi 0, %s64
      %s66 = sphi 0, %s64
      %s67 = sphi 0, %s66
      %s81 = sphi 0, %s67
      %s85 = sphi 0, %s85
      %s87 = sphi 0, %s85
      %s88 = sphi 0, %s87
      %s102 = sphi 0, %s88
      %s106 = sphi 0, %s106
      %s108 = sphi 0, %s106
      %s109 = sphi 0, %s108
      %s123 = sphi 0, %s109
      %s127 = sphi 0, %s127
      %s129 = sphi 0, %s127
      %s130 = sphi 0, %s129
      %s144 = sphi 0, %s130
      %s148 = sphi 0, %s148
      %s150 = sphi 0, %s148
      %s151 = sphi 0, %s150
      %s165 = sphi 0, %s151
      %s173 = sphi 0, %s175
      %s176 = sphi 0, %s173
      %s177 = sphi 0, %s176
      %s193 = sphi 0, %s177
    $region4: #{tpu_custom_call.1} parent=1 // loop_header_branch
      %21 = sbr.rel (%p19) target = $region8
    $region5: #{tpu_custom_call.1} parent=1 // loop_body
      %s23 = ssub.s32 %s18, 1
      %s24 = ssub.s32 %s18, 2
      %s31 = sadd.s32 1, %s26
      %p32 = scmp.ge.s32.totalorder %s31, 1
      %s33 = scalar_select %p32, 0, %s31
      %s34 = sadd.s32 1, %s25
      %s35 = scalar_select %p32, %s34, %s25
      %p36 = scmp.ge.s32.totalorder %s35, 2
      %s37 = scalar_select %p36, 0, %s35
      %s38 = ssub.s32 %s26, %s33
      %p39 = scmp.eq.s32.totalorder %s38, 0
      %s41 = sadd.s32 %s40, 1
      %s42 = scalar_select %p39, %s40, %s41
      %p45 = pneg %p39
      %p46 = scmp.eq.s32.totalorder %s18, 1
      %p47 = por %p45, %p46
      %p48 = scmp.ne.s32.totalorder %s40, %s43
      %p49 = scmp.eq.s32.totalorder %s18, 0
      %p50 = por %p48, %p49
      %p51 = scmp.ne.s32.totalorder %s40, %s43
      %p52 = scmp.eq.s32.totalorder %s23, 1
      %p53 = por %p51, %p52
      %p54 = scmp.ne.s32.totalorder %s43, %s44
      %p55 = scmp.eq.s32.totalorder %s23, 0
      %p56 = por %p54, %p55
      %p57 = scmp.ne.s32.totalorder %s43, %s44
      %p58 = scmp.eq.s32.totalorder %s24, 1
      %p59 = por %p57, %p58
      %p61 = scmp.ne.s32.totalorder %s44, %s60
      %p62 = scmp.eq.s32.totalorder %s24, 0
      %p63 = por %p61, %p62
      %s65 = sadd.s32 %s64, 1
      %p68 = scmp.eq.s32.totalorder %s18, 1
      %p69 = scmp.ne.s32.totalorder %s64, %s66
      %p70 = scmp.eq.s32.totalorder %s18, 0
      %p71 = por %p69, %p70
      %p72 = scmp.ne.s32.totalorder %s64, %s66
      %p73 = scmp.eq.s32.totalorder %s23, 1
      %p74 = por %p72, %p73
      %p75 = scmp.ne.s32.totalorder %s66, %s67
      %p76 = scmp.eq.s32.totalorder %s23, 0
      %p77 = por %p75, %p76
      %p78 = scmp.ne.s32.totalorder %s66, %s67
      %p79 = scmp.eq.s32.totalorder %s24, 1
      %p80 = por %p78, %p79
      %p82 = scmp.ne.s32.totalorder %s67, %s81
      %p83 = scmp.eq.s32.totalorder %s24, 0
      %p84 = por %p82, %p83
      %s86 = sadd.s32 %s85, 1
      %p89 = scmp.eq.s32.totalorder %s18, 1
      %p90 = scmp.ne.s32.totalorder %s85, %s87
      %p91 = scmp.eq.s32.totalorder %s18, 0
      %p92 = por %p90, %p91
      %p93 = scmp.ne.s32.totalorder %s85, %s87
      %p94 = scmp.eq.s32.totalorder %s23, 1
      %p95 = por %p93, %p94
      %p96 = scmp.ne.s32.totalorder %s87, %s88
      %p97 = scmp.eq.s32.totalorder %s23, 0
      %p98 = por %p96, %p97
      %p99 = scmp.ne.s32.totalorder %s87, %s88
      %p100 = scmp.eq.s32.totalorder %s24, 1
      %p101 = por %p99, %p100
      %p103 = scmp.ne.s32.totalorder %s88, %s102
      %p104 = scmp.eq.s32.totalorder %s24, 0
      %p105 = por %p103, %p104
      %s107 = sadd.s32 %s106, 1
      %p110 = scmp.eq.s32.totalorder %s18, 1
      %p111 = scmp.ne.s32.totalorder %s106, %s108
      %p112 = scmp.eq.s32.totalorder %s18, 0
      %p113 = por %p111, %p112
      %p114 = scmp.ne.s32.totalorder %s106, %s108
      %p115 = scmp.eq.s32.totalorder %s23, 1
      %p116 = por %p114, %p115
      %p117 = scmp.ne.s32.totalorder %s108, %s109
      %p118 = scmp.eq.s32.totalorder %s23, 0
      %p119 = por %p117, %p118
      %p120 = scmp.ne.s32.totalorder %s108, %s109
      %p121 = scmp.eq.s32.totalorder %s24, 1
      %p122 = por %p120, %p121
      %p124 = scmp.ne.s32.totalorder %s109, %s123
      %p125 = scmp.eq.s32.totalorder %s24, 0
      %p126 = por %p124, %p125
      %s128 = sadd.s32 %s127, 1
      %p131 = scmp.eq.s32.totalorder %s18, 1
      %p132 = scmp.ne.s32.totalorder %s127, %s129
      %p133 = scmp.eq.s32.totalorder %s18, 0
      %p134 = por %p132, %p133
      %p135 = scmp.ne.s32.totalorder %s127, %s129
      %p136 = scmp.eq.s32.totalorder %s23, 1
      %p137 = por %p135, %p136
      %p138 = scmp.ne.s32.totalorder %s129, %s130
      %p139 = scmp.eq.s32.totalorder %s23, 0
      %p140 = por %p138, %p139
      %p141 = scmp.ne.s32.totalorder %s129, %s130
      %p142 = scmp.eq.s32.totalorder %s24, 1
      %p143 = por %p141, %p142
      %p145 = scmp.ne.s32.totalorder %s130, %s144
      %p146 = scmp.eq.s32.totalorder %s24, 0
      %p147 = por %p145, %p146
      %s149 = sadd.s32 %s148, 1
      %p152 = scmp.eq.s32.totalorder %s18, 1
      %p153 = scmp.ne.s32.totalorder %s148, %s150
      %p154 = scmp.eq.s32.totalorder %s18, 0
      %p155 = por %p153, %p154
      %p156 = scmp.ne.s32.totalorder %s148, %s150
      %p157 = scmp.eq.s32.totalorder %s23, 1
      %p158 = por %p156, %p157
      %p159 = scmp.ne.s32.totalorder %s150, %s151
      %p160 = scmp.eq.s32.totalorder %s23, 0
      %p161 = por %p159, %p160
      %p162 = scmp.ne.s32.totalorder %s150, %s151
      %p163 = scmp.eq.s32.totalorder %s24, 1
      %p164 = por %p162, %p163
      %p166 = scmp.ne.s32.totalorder %s151, %s165
      %p167 = scmp.eq.s32.totalorder %s24, 0
      %p168 = por %p166, %p167
      %s169 = smul.u32 %s26, %s25
      %s170 = smul.u32 %s33, %s37
      %s171 = ssub.s32 %s169, %s170
      %p172 = scmp.eq.s32.totalorder %s171, 0
      %s174 = sadd.s32 %s173, 1
      %s175 = scalar_select %p172, %s173, %s174
      %p178 = pneg %p172
      %p179 = scmp.eq.s32.totalorder %s18, 1
      %p180 = por %p178, %p179
      %p181 = scmp.ne.s32.totalorder %s173, %s176
      %p182 = scmp.eq.s32.totalorder %s18, 0
      %p183 = por %p181, %p182
      %p184 = scmp.ne.s32.totalorder %s173, %s176
      %p185 = scmp.eq.s32.totalorder %s23, 1
      %p186 = por %p184, %p185
      %p187 = scmp.ne.s32.totalorder %s176, %s177
      %p188 = scmp.eq.s32.totalorder %s23, 0
      %p189 = por %p187, %p188
      %p190 = scmp.ne.s32.totalorder %s176, %s177
      %p191 = scmp.eq.s32.totalorder %s24, 1
      %p192 = por %p190, %p191
      %p194 = scmp.ne.s32.totalorder %s177, %s193
      %p195 = scmp.eq.s32.totalorder %s24, 0
      %p196 = por %p194, %p195
      %p197 = scmp.le.s32.totalorder 1, %s18
      %p198 = scmp.lt.s32.totalorder %s18, 3
      %p199 = pnand %p197, %p198
      %p200 = pneg %p199
      // Predicated region
      $region9: #{tpu_custom_call.1} parent=5 // pred_check
        _
      $region10: #{tpu_custom_call.1} parent=5 // pred_check_branch
        %202 = sbr.rel (%p199) target = $region12
      $region11: #{tpu_custom_call.1} parent=5 // pred_region
        %s203 = ssub.s32 %s18, 1
        // Predicated region
        $region13: #{tpu_custom_call.1} parent=11 // pred_check
          %p204 = pneg %p56
        $region14: #{tpu_custom_call.1} parent=11 // pred_check_branch
          %206 = sbr.rel (%p204) target = $region16
        $region15: #{tpu_custom_call.1} parent=11 // pred_region
          %s207 = smul.u32 16, %s28
          %s209 = ssub.s32 1024, 1024
          %210 = vsyncadd [#allocation4], %s209
          %s211 = smul.addr %s207, 64
          %s212 = scalar_lea.hbm %s0, %s211
          %s213 = sshll.u32 [#allocation3], 4
          %s214 = int_to_ptr.vmem [resolvable:$true] %s213
          %219 = dma.hbm_to_vmem [thread:$0]  %s212, 1024, %s214, [#allocation4], 64, 64, 4
        $region16: #{tpu_custom_call.1} parent=11 // pred_fallthru
          _
        // Predicated region
        $region17: #{tpu_custom_call.1} parent=11 // pred_check
          %p220 = pneg %p77
        $region18: #{tpu_custom_call.1} parent=11 // pred_check_branch
          %222 = sbr.rel (%p220) target = $region20
        $region19: #{tpu_custom_call.1} parent=11 // pred_region
          %s224 = ssub.s32 1024, 1024
          %225 = vsyncadd [#allocation7], %s224
          %s226 = sshll.u32 [#allocation6], 4
          %s227 = int_to_ptr.vmem [resolvable:$true] %s226
          %232 = dma.hbm_to_vmem [thread:$0]  %s1, 1024, %s227, [#allocation7], 64, 64, 4
        $region20: #{tpu_custom_call.1} parent=11 // pred_fallthru
          _
        // Predicated region
        $region21: #{tpu_custom_call.1} parent=11 // pred_check
          %p233 = pneg %p98
        $region22: #{tpu_custom_call.1} parent=11 // pred_check_branch
          %235 = sbr.rel (%p233) target = $region24
        $region23: #{tpu_custom_call.1} parent=11 // pred_region
          %s237 = ssub.s32 1024, 1024
          %238 = vsyncadd [#allocation7], %s237
          %s239 = sshll.u32 [#allocation8], 4
          %s240 = int_to_ptr.vmem [resolvable:$true] %s239
          %245 = dma.hbm_to_vmem [thread:$0]  %s2, 1024, %s240, [#allocation7], 64, 64, 4
        $region24: #{tpu_custom_call.1} parent=11 // pred_fallthru
          _
        // Predicated region
        $region25: #{tpu_custom_call.1} parent=11 // pred_check
          %p246 = pneg %p119
        $region26: #{tpu_custom_call.1} parent=11 // pred_check_branch
          %248 = sbr.rel (%p246) target = $region28
        $region27: #{tpu_custom_call.1} parent=11 // pred_region
          _
        $region28: #{tpu_custom_call.1} parent=11 // pred_fallthru
          _
        // Predicated region
        $region29: #{tpu_custom_call.1} parent=11 // pred_check
          %p249 = pneg %p140
        $region30: #{tpu_custom_call.1} parent=11 // pred_check_branch
          %251 = sbr.rel (%p249) target = $region32
        $region31: #{tpu_custom_call.1} parent=11 // pred_region
          %s253 = ssub.s32 1024, 1024
          %254 = vsyncadd [#allocation10], %s253
          %s255 = sshll.u32 [#allocation9], 4
          %s256 = int_to_ptr.vmem [resolvable:$true] %s255
          %261 = dma.hbm_to_vmem [thread:$0]  %s4, 1024, %s256, [#allocation10], 64, 64, 4
        $region32: #{tpu_custom_call.1} parent=11 // pred_fallthru
          _
        // Predicated region
        $region33: #{tpu_custom_call.1} parent=11 // pred_check
          %p262 = pneg %p161
        $region34: #{tpu_custom_call.1} parent=11 // pred_check_branch
          %264 = sbr.rel (%p262) target = $region36
        $region35: #{tpu_custom_call.1} parent=11 // pred_region
          _
        $region36: #{tpu_custom_call.1} parent=11 // pred_fallthru
          _
      $region12: #{tpu_custom_call.1} parent=5 // pred_fallthru
        _
      %p265 = scmp.lt.s32.totalorder %s18, 2
      // Predicated region
      $region37: #{tpu_custom_call.1} parent=5 // pred_check
        %p266 = pneg %p265
      $region38: #{tpu_custom_call.1} parent=5 // pred_check_branch
        %268 = sbr.rel (%p266) target = $region40
      $region39: #{tpu_custom_call.1} parent=5 // pred_region
        _
      $region40: #{tpu_custom_call.1} parent=5 // pred_fallthru
        _
      %p269 = scmp.le.s32.totalorder 1, %s18
      %p270 = scmp.lt.s32.totalorder %s18, 3
      %p271 = pnand %p269, %p270
      %p272 = pneg %p271
      // Predicated region
      $region41: #{tpu_custom_call.1} parent=5 // pred_check
        _
      $region42: #{tpu_custom_call.1} parent=5 // pred_check_branch
        %274 = sbr.rel (%p271) target = $region44
      $region43: #{tpu_custom_call.1} parent=5 // pred_region
        %s275 = ssub.s32 %s18, 1
        // Predicated region
        $region45: #{tpu_custom_call.1} parent=43 // pred_check
          %p276 = pneg %p56
        $region46: #{tpu_custom_call.1} parent=43 // pred_check_branch
          %278 = sbr.rel (%p276) target = $region48
        $region47: #{tpu_custom_call.1} parent=43 // pred_region
          %279 = dma.done [#allocation4], 1024
        $region48: #{tpu_custom_call.1} parent=43 // pred_fallthru
          _
        // Predicated region
        $region49: #{tpu_custom_call.1} parent=43 // pred_check
          %p280 = pneg %p77
        $region50: #{tpu_custom_call.1} parent=43 // pred_check_branch
          %282 = sbr.rel (%p280) target = $region52
        $region51: #{tpu_custom_call.1} parent=43 // pred_region
          %283 = dma.done [#allocation7], 1024
        $region52: #{tpu_custom_call.1} parent=43 // pred_fallthru
          _
        // Predicated region
        $region53: #{tpu_custom_call.1} parent=43 // pred_check
          %p284 = pneg %p98
        $region54: #{tpu_custom_call.1} parent=43 // pred_check_branch
          %286 = sbr.rel (%p284) target = $region56
        $region55: #{tpu_custom_call.1} parent=43 // pred_region
          %287 = dma.done [#allocation7], 1024
        $region56: #{tpu_custom_call.1} parent=43 // pred_fallthru
          _
        // Predicated region
        $region57: #{tpu_custom_call.1} parent=43 // pred_check
          %p288 = pneg %p140
        $region58: #{tpu_custom_call.1} parent=43 // pred_check_branch
          %290 = sbr.rel (%p288) target = $region60
        $region59: #{tpu_custom_call.1} parent=43 // pred_region
          %291 = dma.done [#allocation10], 1024
        $region60: #{tpu_custom_call.1} parent=43 // pred_fallthru
          _
        %p292 = pneg %p56
        %p293 = pneg %p53
        %p294 = pneg %p77
        %p295 = pneg %p74
        %p296 = pneg %p98
        %p297 = pneg %p95
        %p298 = pneg %p119
        %p299 = pneg %p116
        %p300 = pneg %p140
        %p301 = pneg %p137
        %p302 = pneg %p161
        %p303 = pneg %p158
        %p304 = pneg %p189
        %p305 = pneg %p186
        %s306 = sand.u32 %s176, 1
        %s307 = scalar_lea.sflag [#allocation5], %s306
        %s308 = sand.u32 %s176, 1
        %s309 = smul.addr %s308, 64
        %s310 = scalar_lea.vmem [#allocation11], %s309
        %s311 = smul.u32 16, %s28
        %s312 = smul.u32 %s28, %s27
        %s313 = smul.u32 16, %s312
        %p315 = scmp.eq.s32.totalorder %s27, 0
        // Predicated region
        $region61: #{tpu_custom_call.1} parent=43 // pred_check
          %p316 = pneg %p315
        $region62: #{tpu_custom_call.1} parent=43 // pred_check_branch
          %318 = sbr.rel (%p316) target = $region64
        $region63: #{tpu_custom_call.1} parent=43 // pred_region
          %v319 = vld [vmem:[#allocation3] sm:$0xf]
          %v320 = vld [vmem:[#allocation3 + $0x4] sm:$0xf]
          %v321 = vld [vmem:[#allocation3 + $0x8] sm:$0xf]
          %v322 = vld [vmem:[#allocation3 + $0xc] sm:$0xf]
          %v323 = vld [vmem:[#allocation3 + $0x10] sm:$0xf]
          %v324 = vld [vmem:[#allocation3 + $0x14] sm:$0xf]
          %v325 = vld [vmem:[#allocation3 + $0x18] sm:$0xf]
          %v326 = vld [vmem:[#allocation3 + $0x1c] sm:$0xf]
          %v327 = vld [vmem:[#allocation3 + $0x20] sm:$0xf]
          %v328 = vld [vmem:[#allocation3 + $0x24] sm:$0xf]
          %v329 = vld [vmem:[#allocation3 + $0x28] sm:$0xf]
          %v330 = vld [vmem:[#allocation3 + $0x2c] sm:$0xf]
          %v331 = vld [vmem:[#allocation3 + $0x30] sm:$0xf]
          %v332 = vld [vmem:[#allocation3 + $0x34] sm:$0xf]
          %v333 = vld [vmem:[#allocation3 + $0x38] sm:$0xf]
          %v334 = vld [vmem:[#allocation3 + $0x3c] sm:$0xf]
          %v335 = vld [vmem:[#allocation6] sm:$0xf]
          %v336 = vld [vmem:[#allocation6 + $0x4] sm:$0xf]
          %v337 = vld [vmem:[#allocation6 + $0x8] sm:$0xf]
          %v338 = vld [vmem:[#allocation6 + $0xc] sm:$0xf]
          %v339 = vld [vmem:[#allocation6 + $0x10] sm:$0xf]
          %v340 = vld [vmem:[#allocation6 + $0x14] sm:$0xf]
          %v341 = vld [vmem:[#allocation6 + $0x18] sm:$0xf]
          %v342 = vld [vmem:[#allocation6 + $0x1c] sm:$0xf]
          %v343 = vld [vmem:[#allocation6 + $0x20] sm:$0xf]
          %v344 = vld [vmem:[#allocation6 + $0x24] sm:$0xf]
          %v345 = vld [vmem:[#allocation6 + $0x28] sm:$0xf]
          %v346 = vld [vmem:[#allocation6 + $0x2c] sm:$0xf]
          %v347 = vld [vmem:[#allocation6 + $0x30] sm:$0xf]
          %v348 = vld [vmem:[#allocation6 + $0x34] sm:$0xf]
          %v349 = vld [vmem:[#allocation6 + $0x38] sm:$0xf]
          %v350 = vld [vmem:[#allocation6 + $0x3c] sm:$0xf]
          %v367 = vunpack.c.l.b16 %v319
          %v368 = vunpack.c.l.b16 %v320
          %v369 = vunpack.c.l.b16 %v321
          %v370 = vunpack.c.l.b16 %v322
          %v371 = vunpack.c.l.b16 %v323
          %v372 = vunpack.c.l.b16 %v324
          %v373 = vunpack.c.l.b16 %v325
          %v374 = vunpack.c.l.b16 %v326
          %v375 = vunpack.c.l.b16 %v327
          %v376 = vunpack.c.l.b16 %v328
          %v377 = vunpack.c.l.b16 %v329
          %v378 = vunpack.c.l.b16 %v330
          %v379 = vunpack.c.l.b16 %v331
          %v380 = vunpack.c.l.b16 %v332
          %v381 = vunpack.c.l.b16 %v333
          %v382 = vunpack.c.l.b16 %v334
          %v383 = vpack.c.b16 %v368, %v367
          %v384 = vpack.c.b16 %v370, %v369
          %v385 = vpack.c.b16 %v372, %v371
          %v386 = vpack.c.b16 %v374, %v373
          %v387 = vpack.c.b16 %v376, %v375
          %v388 = vpack.c.b16 %v378, %v377
          %v389 = vpack.c.b16 %v380, %v379
          %v390 = vpack.c.b16 %v382, %v381
          %v415 = vunpack.c.l.b16 %v335
          %v416 = vunpack.c.l.b16 %v336
          %v417 = vunpack.c.l.b16 %v337
          %v418 = vunpack.c.l.b16 %v338
          %v419 = vunpack.c.l.b16 %v339
          %v420 = vunpack.c.l.b16 %v340
          %v421 = vunpack.c.l.b16 %v341
          %v422 = vunpack.c.l.b16 %v342
          %v423 = vunpack.c.l.b16 %v343
          %v424 = vunpack.c.l.b16 %v344
          %v425 = vunpack.c.l.b16 %v345
          %v426 = vunpack.c.l.b16 %v346
          %v427 = vunpack.c.l.b16 %v347
          %v428 = vunpack.c.l.b16 %v348
          %v429 = vunpack.c.l.b16 %v349
          %v430 = vunpack.c.l.b16 %v350
          %v431 = vpack.c.b16 %v416, %v415
          %v432 = vpack.c.b16 %v418, %v417
          %v433 = vpack.c.b16 %v420, %v419
          %v434 = vpack.c.b16 %v422, %v421
          %v435 = vpack.c.b16 %v424, %v423
          %v436 = vpack.c.b16 %v426, %v425
          %v437 = vpack.c.b16 %v428, %v427
          %v438 = vpack.c.b16 %v430, %v429
          %447 = vmatprep.subr.bf16.mxu0 0
          %448 = vmatpush1.bf16.msra.mxu0 %v438
          %449 = vmatprep.subr.bf16.mxu0 0
          %450 = vmatpush1.bf16.msra.mxu0 %v437
          %451 = vmatprep.subr.bf16.mxu0 0
          %452 = vmatpush1.bf16.msra.mxu0 %v436
          %453 = vmatprep.subr.bf16.mxu0 0
          %454 = vmatpush1.bf16.msra.mxu0 %v435
          %455 = vmatprep.subr.bf16.mxu0 0
          %456 = vmatpush1.bf16.msra.mxu0 %v434
          %457 = vmatprep.subr.bf16.mxu0 0
          %458 = vmatpush1.bf16.msra.mxu0 %v433
          %459 = vmatprep.subr.bf16.mxu0 0
          %460 = vmatpush1.bf16.msra.mxu0 %v432
          %461 = vmatprep.subr.bf16.mxu0 0
          %462 = vmatpush1.bf16.msra.mxu0 %v431
          %463 = vmatprep.subr.bf16.mxu0 0
          %464 = vmatpush2.bf16.msra.mxu0 0
          %465 = vmatprep.subr.bf16.mxu0 0
          %466 = vmatpush2.bf16.msra.mxu0 0
          %467 = vmatprep.subr.bf16.mxu0 0
          %468 = vmatpush2.bf16.msra.mxu0 0
          %469 = vmatprep.subr.bf16.mxu0 0
          %470 = vmatpush2.bf16.msra.mxu0 0
          %471 = vmatprep.subr.bf16.mxu0 0
          %472 = vmatpush2.bf16.msra.mxu0 0
          %473 = vmatprep.subr.bf16.mxu0 0
          %474 = vmatpush2.bf16.msra.mxu0 0
          %475 = vmatprep.subr.bf16.mxu0 0
          %476 = vmatpush2.bf16.msra.mxu0 0
          %477 = vmatprep.subr.bf16.mxu0 0
          %478 = vmatpush2.bf16.msra.mxu0 0
          %479 = vmatprep.mubr.bf16.mxu0 0
          %480 = vmatmul.mubr.bf16.gmra.mxu0 %v383
          %v481 = vpop.f32.mrf.mxu0
          %v482 = vadd.f32 0.0, %v481
          %v483 = vpop.f32.mrf.mxu0
          %v484 = vpop.f32.mrf.mxu0
          %v485 = vadd.f32 0.0, %v484
          %v486 = vpop.f32.mrf.mxu0
          %487 = vmatprep.mubr.bf16.mxu0 0
          %488 = vmatmul.mubr.bf16.gmra.mxu0 %v384
          %v489 = vpop.f32.mrf.mxu0
          %v490 = vadd.f32 0.0, %v489
          %v491 = vpop.f32.mrf.mxu0
          %v492 = vpop.f32.mrf.mxu0
          %v493 = vadd.f32 0.0, %v492
          %v494 = vpop.f32.mrf.mxu0
          %495 = vmatprep.mubr.bf16.mxu0 0
          %496 = vmatmul.mubr.bf16.gmra.mxu0 %v385
          %v497 = vpop.f32.mrf.mxu0
          %v498 = vadd.f32 0.0, %v497
          %v499 = vpop.f32.mrf.mxu0
          %v500 = vpop.f32.mrf.mxu0
          %v501 = vadd.f32 0.0, %v500
          %v502 = vpop.f32.mrf.mxu0
          %503 = vmatprep.mubr.bf16.mxu0 0
          %504 = vmatmul.mubr.bf16.gmra.mxu0 %v386
          %v505 = vpop.f32.mrf.mxu0
          %v506 = vadd.f32 0.0, %v505
          %v507 = vpop.f32.mrf.mxu0
          %v508 = vpop.f32.mrf.mxu0
          %v509 = vadd.f32 0.0, %v508
          %v510 = vpop.f32.mrf.mxu0
          %511 = vmatprep.mubr.bf16.mxu0 0
          %512 = vmatmul.mubr.bf16.gmra.mxu0 %v387
          %v513 = vpop.f32.mrf.mxu0
          %v514 = vadd.f32 0.0, %v513
          %v515 = vpop.f32.mrf.mxu0
          %v516 = vpop.f32.mrf.mxu0
          %v517 = vadd.f32 0.0, %v516
          %v518 = vpop.f32.mrf.mxu0
          %519 = vmatprep.mubr.bf16.mxu0 0
          %520 = vmatmul.mubr.bf16.gmra.mxu0 %v388
          %v521 = vpop.f32.mrf.mxu0
          %v522 = vadd.f32 0.0, %v521
          %v523 = vpop.f32.mrf.mxu0
          %v524 = vpop.f32.mrf.mxu0
          %v525 = vadd.f32 0.0, %v524
          %v526 = vpop.f32.mrf.mxu0
          %527 = vmatprep.mubr.bf16.mxu0 0
          %528 = vmatmul.mubr.bf16.gmra.mxu0 %v389
          %v529 = vpop.f32.mrf.mxu0
          %v530 = vadd.f32 0.0, %v529
          %v531 = vpop.f32.mrf.mxu0
          %v532 = vpop.f32.mrf.mxu0
          %v533 = vadd.f32 0.0, %v532
          %v534 = vpop.f32.mrf.mxu0
          %535 = vmatprep.mubr.bf16.mxu0 0
          %536 = vmatmul.mubr.bf16.gmra.mxu0 %v390
          %v537 = vpop.f32.mrf.mxu0
          %v538 = vadd.f32 0.0, %v537
          %v539 = vpop.f32.mrf.mxu0
          %v540 = vpop.f32.mrf.mxu0
          %v541 = vadd.f32 0.0, %v540
          %v542 = vpop.f32.mrf.mxu0
          %543 = vdwg.mxu0
          %v544 = vpack.c.bf16 %v485, %v482
          %v545 = vpack.c.bf16 %v493, %v490
          %v546 = vpack.c.bf16 %v501, %v498
          %v547 = vpack.c.bf16 %v509, %v506
          %v548 = vpack.c.bf16 %v517, %v514
          %v549 = vpack.c.bf16 %v525, %v522
          %v550 = vpack.c.bf16 %v533, %v530
          %v551 = vpack.c.bf16 %v541, %v538
          %v552 = vld [vmem:[#allocation8] sm:$0xf]
          %v553 = vld [vmem:[#allocation8 + $0x4] sm:$0xf]
          %v554 = vld [vmem:[#allocation8 + $0x8] sm:$0xf]
          %v555 = vld [vmem:[#allocation8 + $0xc] sm:$0xf]
          %v556 = vld [vmem:[#allocation8 + $0x10] sm:$0xf]
          %v557 = vld [vmem:[#allocation8 + $0x14] sm:$0xf]
          %v558 = vld [vmem:[#allocation8 + $0x18] sm:$0xf]
          %v559 = vld [vmem:[#allocation8 + $0x1c] sm:$0xf]
          %v560 = vld [vmem:[#allocation8 + $0x20] sm:$0xf]
          %v561 = vld [vmem:[#allocation8 + $0x24] sm:$0xf]
          %v562 = vld [vmem:[#allocation8 + $0x28] sm:$0xf]
          %v563 = vld [vmem:[#allocation8 + $0x2c] sm:$0xf]
          %v564 = vld [vmem:[#allocation8 + $0x30] sm:$0xf]
          %v565 = vld [vmem:[#allocation8 + $0x34] sm:$0xf]
          %v566 = vld [vmem:[#allocation8 + $0x38] sm:$0xf]
          %v567 = vld [vmem:[#allocation8 + $0x3c] sm:$0xf]
          %v568 = vld [vmem:[%s3] sm:$0x1]
          %v570 = vlaneseq
          %v571 = vshrl.u32 %v570, 7
          %v572 = vsub.s32 0, %v571
          %v573 = vrot.slane %v568, %v572
          %v591 = vunpack.c.l.b16 %v552
          %v592 = vunpack.c.l.b16 %v553
          %v593 = vunpack.c.l.b16 %v554
          %v594 = vunpack.c.l.b16 %v555
          %v595 = vunpack.c.l.b16 %v556
          %v596 = vunpack.c.l.b16 %v557
          %v597 = vunpack.c.l.b16 %v558
          %v598 = vunpack.c.l.b16 %v559
          %v599 = vunpack.c.l.b16 %v560
          %v600 = vunpack.c.l.b16 %v561
          %v601 = vunpack.c.l.b16 %v562
          %v602 = vunpack.c.l.b16 %v563
          %v603 = vunpack.c.l.b16 %v564
          %v604 = vunpack.c.l.b16 %v565
          %v605 = vunpack.c.l.b16 %v566
          %v606 = vunpack.c.l.b16 %v567
          %v607 = vpack.c.b16 %v592, %v591
          %v608 = vpack.c.b16 %v594, %v593
          %v609 = vpack.c.b16 %v596, %v595
          %v610 = vpack.c.b16 %v598, %v597
          %v611 = vpack.c.b16 %v600, %v599
          %v612 = vpack.c.b16 %v602, %v601
          %v613 = vpack.c.b16 %v604, %v603
          %v614 = vpack.c.b16 %v606, %v605
          %623 = vmatprep.subr.bf16.mxu0 0
          %624 = vmatpush1.bf16.msra.mxu0 %v614
          %625 = vmatprep.subr.bf16.mxu0 0
          %626 = vmatpush1.bf16.msra.mxu0 %v613
          %627 = vmatprep.subr.bf16.mxu0 0
          %628 = vmatpush1.bf16.msra.mxu0 %v612
          %629 = vmatprep.subr.bf16.mxu0 0
          %630 = vmatpush1.bf16.msra.mxu0 %v611
          %631 = vmatprep.subr.bf16.mxu0 0
          %632 = vmatpush1.bf16.msra.mxu0 %v610
          %633 = vmatprep.subr.bf16.mxu0 0
          %634 = vmatpush1.bf16.msra.mxu0 %v609
          %635 = vmatprep.subr.bf16.mxu0 0
          %636 = vmatpush1.bf16.msra.mxu0 %v608
          %637 = vmatprep.subr.bf16.mxu0 0
          %638 = vmatpush1.bf16.msra.mxu0 %v607
          %639 = vmatprep.subr.bf16.mxu0 0
          %640 = vmatpush2.bf16.msra.mxu0 0
          %641 = vmatprep.subr.bf16.mxu0 0
          %642 = vmatpush2.bf16.msra.mxu0 0
          %643 = vmatprep.subr.bf16.mxu0 0
          %644 = vmatpush2.bf16.msra.mxu0 0
          %645 = vmatprep.subr.bf16.mxu0 0
          %646 = vmatpush2.bf16.msra.mxu0 0
          %647 = vmatprep.subr.bf16.mxu0 0
          %648 = vmatpush2.bf16.msra.mxu0 0
          %649 = vmatprep.subr.bf16.mxu0 0
          %650 = vmatpush2.bf16.msra.mxu0 0
          %651 = vmatprep.subr.bf16.mxu0 0
          %652 = vmatpush2.bf16.msra.mxu0 0
          %653 = vmatprep.subr.bf16.mxu0 0
          %654 = vmatpush2.bf16.msra.mxu0 0
          %655 = vmatprep.mubr.bf16.mxu0 0
          %656 = vmatmul.mubr.bf16.gmra.mxu0 %v544
          %v657 = vpop.f32.mrf.mxu0
          %v658 = vadd.f32 %v573, %v657
          %v659 = vpop.f32.mrf.mxu0
          %v660 = vpop.f32.mrf.mxu0
          %v661 = vadd.f32 %v573, %v660
          %v662 = vpop.f32.mrf.mxu0
          %663 = vmatprep.mubr.bf16.mxu0 0
          %664 = vmatmul.mubr.bf16.gmra.mxu0 %v545
          %v665 = vpop.f32.mrf.mxu0
          %v666 = vadd.f32 %v573, %v665
          %v667 = vpop.f32.mrf.mxu0
          %v668 = vpop.f32.mrf.mxu0
          %v669 = vadd.f32 %v573, %v668
          %v670 = vpop.f32.mrf.mxu0
          %671 = vmatprep.mubr.bf16.mxu0 0
          %672 = vmatmul.mubr.bf16.gmra.mxu0 %v546
          %v673 = vpop.f32.mrf.mxu0
          %v674 = vadd.f32 %v573, %v673
          %v675 = vpop.f32.mrf.mxu0
          %v676 = vpop.f32.mrf.mxu0
          %v677 = vadd.f32 %v573, %v676
          %v678 = vpop.f32.mrf.mxu0
          %679 = vmatprep.mubr.bf16.mxu0 0
          %680 = vmatmul.mubr.bf16.gmra.mxu0 %v547
          %v681 = vpop.f32.mrf.mxu0
          %v682 = vadd.f32 %v573, %v681
          %v683 = vpop.f32.mrf.mxu0
          %v684 = vpop.f32.mrf.mxu0
          %v685 = vadd.f32 %v573, %v684
          %v686 = vpop.f32.mrf.mxu0
          %687 = vmatprep.mubr.bf16.mxu0 0
          %688 = vmatmul.mubr.bf16.gmra.mxu0 %v548
          %v689 = vpop.f32.mrf.mxu0
          %v690 = vadd.f32 %v573, %v689
          %v691 = vpop.f32.mrf.mxu0
          %v692 = vpop.f32.mrf.mxu0
          %v693 = vadd.f32 %v573, %v692
          %v694 = vpop.f32.mrf.mxu0
          %695 = vmatprep.mubr.bf16.mxu0 0
          %696 = vmatmul.mubr.bf16.gmra.mxu0 %v549
          %v697 = vpop.f32.mrf.mxu0
          %v698 = vadd.f32 %v573, %v697
          %v699 = vpop.f32.mrf.mxu0
          %v700 = vpop.f32.mrf.mxu0
          %v701 = vadd.f32 %v573, %v700
          %v702 = vpop.f32.mrf.mxu0
          %703 = vmatprep.mubr.bf16.mxu0 0
          %704 = vmatmul.mubr.bf16.gmra.mxu0 %v550
          %v705 = vpop.f32.mrf.mxu0
          %v706 = vadd.f32 %v573, %v705
          %v707 = vpop.f32.mrf.mxu0
          %v708 = vpop.f32.mrf.mxu0
          %v709 = vadd.f32 %v573, %v708
          %v710 = vpop.f32.mrf.mxu0
          %711 = vmatprep.mubr.bf16.mxu0 0
          %712 = vmatmul.mubr.bf16.gmra.mxu0 %v551
          %v713 = vpop.f32.mrf.mxu0
          %v714 = vadd.f32 %v573, %v713
          %v715 = vpop.f32.mrf.mxu0
          %v716 = vpop.f32.mrf.mxu0
          %v717 = vadd.f32 %v573, %v716
          %v718 = vpop.f32.mrf.mxu0
          %719 = vdwg.mxu0
          %v720 = vmax.f32 %v658, 0.0
          %v721 = vmax.f32 %v661, 0.0
          %v722 = vmax.f32 %v666, 0.0
          %v723 = vmax.f32 %v669, 0.0
          %v724 = vmax.f32 %v674, 0.0
          %v725 = vmax.f32 %v677, 0.0
          %v726 = vmax.f32 %v682, 0.0
          %v727 = vmax.f32 %v685, 0.0
          %v728 = vmax.f32 %v690, 0.0
          %v729 = vmax.f32 %v693, 0.0
          %v730 = vmax.f32 %v698, 0.0
          %v731 = vmax.f32 %v701, 0.0
          %v732 = vmax.f32 %v706, 0.0
          %v733 = vmax.f32 %v709, 0.0
          %v734 = vmax.f32 %v714, 0.0
          %v735 = vmax.f32 %v717, 0.0
          %s736 = smul.u32 %s28, 128
          %v737 = vpack.c.bf16 %v721, %v720
          %v738 = vpack.c.bf16 %v723, %v722
          %v739 = vpack.c.bf16 %v725, %v724
          %v740 = vpack.c.bf16 %v727, %v726
          %v741 = vpack.c.bf16 %v729, %v728
          %v742 = vpack.c.bf16 %v731, %v730
          %v743 = vpack.c.bf16 %v733, %v732
          %v744 = vpack.c.bf16 %v735, %v734
          %v753 = vunpack.c.l.b16 %v737
          %v754 = vunpack.c.h.b16 %v737
          %v755 = vunpack.c.l.b16 %v738
          %v756 = vunpack.c.h.b16 %v738
          %v757 = vunpack.c.l.b16 %v739
          %v758 = vunpack.c.h.b16 %v739
          %v759 = vunpack.c.l.b16 %v740
          %v760 = vunpack.c.h.b16 %v740
          %v761 = vunpack.c.l.b16 %v741
          %v762 = vunpack.c.h.b16 %v741
          %v763 = vunpack.c.l.b16 %v742
          %v764 = vunpack.c.h.b16 %v742
          %v765 = vunpack.c.l.b16 %v743
          %v766 = vunpack.c.h.b16 %v743
          %v767 = vunpack.c.l.b16 %v744
          %v768 = vunpack.c.h.b16 %v744
          %v769 = vpack.c.b16 %v753, %v753
          %v770 = vpack.c.b16 %v754, %v754
          %v771 = vpack.c.b16 %v755, %v755
          %v772 = vpack.c.b16 %v756, %v756
          %v773 = vpack.c.b16 %v757, %v757
          %v774 = vpack.c.b16 %v758, %v758
          %v775 = vpack.c.b16 %v759, %v759
          %v776 = vpack.c.b16 %v760, %v760
          %v777 = vpack.c.b16 %v761, %v761
          %v778 = vpack.c.b16 %v762, %v762
          %v779 = vpack.c.b16 %v763, %v763
          %v780 = vpack.c.b16 %v764, %v764
          %v781 = vpack.c.b16 %v765, %v765
          %v782 = vpack.c.b16 %v766, %v766
          %v783 = vpack.c.b16 %v767, %v767
          %v784 = vpack.c.b16 %v768, %v768
          %s801 = sshra.s32 %s736, 3
          %s802 = sand.u32 %s736, 7
          %s803 = smul.addr %s801, 4
          %s804 = scalar_lea.vmem [#allocation2], %s803
          %805 = vst [vmem:[%s804] sm:$0xf] %v769
          %806 = vst [vmem:[%s804 + $0x4] sm:$0xf] %v770
          %807 = vst [vmem:[%s804 + $0x8] sm:$0xf] %v771
          %808 = vst [vmem:[%s804 + $0xc] sm:$0xf] %v772
          %809 = vst [vmem:[%s804 + $0x10] sm:$0xf] %v773
          %810 = vst [vmem:[%s804 + $0x14] sm:$0xf] %v774
          %811 = vst [vmem:[%s804 + $0x18] sm:$0xf] %v775
          %812 = vst [vmem:[%s804 + $0x1c] sm:$0xf] %v776
          %813 = vst [vmem:[%s804 + $0x20] sm:$0xf] %v777
          %814 = vst [vmem:[%s804 + $0x24] sm:$0xf] %v778
          %815 = vst [vmem:[%s804 + $0x28] sm:$0xf] %v779
          %816 = vst [vmem:[%s804 + $0x2c] sm:$0xf] %v780
          %817 = vst [vmem:[%s804 + $0x30] sm:$0xf] %v781
          %818 = vst [vmem:[%s804 + $0x34] sm:$0xf] %v782
          %819 = vst [vmem:[%s804 + $0x38] sm:$0xf] %v783
          %820 = vst [vmem:[%s804 + $0x3c] sm:$0xf] %v784
        $region64: #{tpu_custom_call.1} parent=43 // pred_fallthru
          _
        %p821 = scmp.eq.s32.totalorder %s27, 1
        // Predicated region
        $region65: #{tpu_custom_call.1} parent=43 // pred_check
          %p822 = pneg %p821
        $region66: #{tpu_custom_call.1} parent=43 // pred_check_branch
          %824 = sbr.rel (%p822) target = $region68
        $region67: #{tpu_custom_call.1} parent=43 // pred_region
          %v825 = vld [vmem:[#allocation3] sm:$0xf]
          %v826 = vld [vmem:[#allocation3 + $0x4] sm:$0xf]
          %v827 = vld [vmem:[#allocation3 + $0x8] sm:$0xf]
          %v828 = vld [vmem:[#allocation3 + $0xc] sm:$0xf]
          %v829 = vld [vmem:[#allocation3 + $0x10] sm:$0xf]
          %v830 = vld [vmem:[#allocation3 + $0x14] sm:$0xf]
          %v831 = vld [vmem:[#allocation3 + $0x18] sm:$0xf]
          %v832 = vld [vmem:[#allocation3 + $0x1c] sm:$0xf]
          %v833 = vld [vmem:[#allocation3 + $0x20] sm:$0xf]
          %v834 = vld [vmem:[#allocation3 + $0x24] sm:$0xf]
          %v835 = vld [vmem:[#allocation3 + $0x28] sm:$0xf]
          %v836 = vld [vmem:[#allocation3 + $0x2c] sm:$0xf]
          %v837 = vld [vmem:[#allocation3 + $0x30] sm:$0xf]
          %v838 = vld [vmem:[#allocation3 + $0x34] sm:$0xf]
          %v839 = vld [vmem:[#allocation3 + $0x38] sm:$0xf]
          %v840 = vld [vmem:[#allocation3 + $0x3c] sm:$0xf]
          %v841 = vld [vmem:[#allocation2] sm:$0xf]
          %v842 = vld [vmem:[#allocation2 + $0x4] sm:$0xf]
          %v843 = vld [vmem:[#allocation2 + $0x8] sm:$0xf]
          %v844 = vld [vmem:[#allocation2 + $0xc] sm:$0xf]
          %v845 = vld [vmem:[#allocation2 + $0x10] sm:$0xf]
          %v846 = vld [vmem:[#allocation2 + $0x14] sm:$0xf]
          %v847 = vld [vmem:[#allocation2 + $0x18] sm:$0xf]
          %v848 = vld [vmem:[#allocation2 + $0x1c] sm:$0xf]
          %v849 = vld [vmem:[#allocation2 + $0x20] sm:$0xf]
          %v850 = vld [vmem:[#allocation2 + $0x24] sm:$0xf]
          %v851 = vld [vmem:[#allocation2 + $0x28] sm:$0xf]
          %v852 = vld [vmem:[#allocation2 + $0x2c] sm:$0xf]
          %v853 = vld [vmem:[#allocation2 + $0x30] sm:$0xf]
          %v854 = vld [vmem:[#allocation2 + $0x34] sm:$0xf]
          %v855 = vld [vmem:[#allocation2 + $0x38] sm:$0xf]
          %v856 = vld [vmem:[#allocation2 + $0x3c] sm:$0xf]
          %v873 = vunpack.c.l.b16 %v825
          %v874 = vunpack.c.l.b16 %v826
          %v875 = vunpack.c.l.b16 %v827
          %v876 = vunpack.c.l.b16 %v828
          %v877 = vunpack.c.l.b16 %v829
          %v878 = vunpack.c.l.b16 %v830
          %v879 = vunpack.c.l.b16 %v831
          %v880 = vunpack.c.l.b16 %v832
          %v881 = vunpack.c.l.b16 %v833
          %v882 = vunpack.c.l.b16 %v834
          %v883 = vunpack.c.l.b16 %v835
          %v884 = vunpack.c.l.b16 %v836
          %v885 = vunpack.c.l.b16 %v837
          %v886 = vunpack.c.l.b16 %v838
          %v887 = vunpack.c.l.b16 %v839
          %v888 = vunpack.c.l.b16 %v840
          %v889 = vpack.c.b16 %v874, %v873
          %v890 = vpack.c.b16 %v876, %v875
          %v891 = vpack.c.b16 %v878, %v877
          %v892 = vpack.c.b16 %v880, %v879
          %v893 = vpack.c.b16 %v882, %v881
          %v894 = vpack.c.b16 %v884, %v883
          %v895 = vpack.c.b16 %v886, %v885
          %v896 = vpack.c.b16 %v888, %v887
          %v921 = vunpack.c.l.b16 %v841
          %v922 = vunpack.c.l.b16 %v842
          %v923 = vunpack.c.l.b16 %v843
          %v924 = vunpack.c.l.b16 %v844
          %v925 = vunpack.c.l.b16 %v845
          %v926 = vunpack.c.l.b16 %v846
          %v927 = vunpack.c.l.b16 %v847
          %v928 = vunpack.c.l.b16 %v848
          %v929 = vunpack.c.l.b16 %v849
          %v930 = vunpack.c.l.b16 %v850
          %v931 = vunpack.c.l.b16 %v851
          %v932 = vunpack.c.l.b16 %v852
          %v933 = vunpack.c.l.b16 %v853
          %v934 = vunpack.c.l.b16 %v854
          %v935 = vunpack.c.l.b16 %v855
          %v936 = vunpack.c.l.b16 %v856
          %v937 = vpack.c.b16 %v922, %v921
          %v938 = vpack.c.b16 %v924, %v923
          %v939 = vpack.c.b16 %v926, %v925
          %v940 = vpack.c.b16 %v928, %v927
          %v941 = vpack.c.b16 %v930, %v929
          %v942 = vpack.c.b16 %v932, %v931
          %v943 = vpack.c.b16 %v934, %v933
          %v944 = vpack.c.b16 %v936, %v935
          %953 = vmatprep.subr.bf16.mxu0 0
          %954 = vmatpush1.bf16.msra.mxu0 %v944
          %955 = vmatprep.subr.bf16.mxu0 0
          %956 = vmatpush1.bf16.msra.mxu0 %v943
          %957 = vmatprep.subr.bf16.mxu0 0
          %958 = vmatpush1.bf16.msra.mxu0 %v942
          %959 = vmatprep.subr.bf16.mxu0 0
          %960 = vmatpush1.bf16.msra.mxu0 %v941
          %961 = vmatprep.subr.bf16.mxu0 0
          %962 = vmatpush1.bf16.msra.mxu0 %v940
          %963 = vmatprep.subr.bf16.mxu0 0
          %964 = vmatpush1.bf16.msra.mxu0 %v939
          %965 = vmatprep.subr.bf16.mxu0 0
          %966 = vmatpush1.bf16.msra.mxu0 %v938
          %967 = vmatprep.subr.bf16.mxu0 0
          %968 = vmatpush1.bf16.msra.mxu0 %v937
          %969 = vmatprep.subr.bf16.mxu0 0
          %970 = vmatpush2.bf16.msra.mxu0 0
          %971 = vmatprep.subr.bf16.mxu0 0
          %972 = vmatpush2.bf16.msra.mxu0 0
          %973 = vmatprep.subr.bf16.mxu0 0
          %974 = vmatpush2.bf16.msra.mxu0 0
          %975 = vmatprep.subr.bf16.mxu0 0
          %976 = vmatpush2.bf16.msra.mxu0 0
          %977 = vmatprep.subr.bf16.mxu0 0
          %978 = vmatpush2.bf16.msra.mxu0 0
          %979 = vmatprep.subr.bf16.mxu0 0
          %980 = vmatpush2.bf16.msra.mxu0 0
          %981 = vmatprep.subr.bf16.mxu0 0
          %982 = vmatpush2.bf16.msra.mxu0 0
          %983 = vmatprep.subr.bf16.mxu0 0
          %984 = vmatpush2.bf16.msra.mxu0 0
          %985 = vmatprep.mubr.bf16.mxu0 0
          %986 = vmatmul.mubr.bf16.gmra.mxu0 %v889
          %v987 = vpop.f32.mrf.mxu0
          %v988 = vadd.f32 0.0, %v987
          %v989 = vpop.f32.mrf.mxu0
          %v990 = vpop.f32.mrf.mxu0
          %v991 = vadd.f32 0.0, %v990
          %v992 = vpop.f32.mrf.mxu0
          %993 = vmatprep.mubr.bf16.mxu0 0
          %994 = vmatmul.mubr.bf16.gmra.mxu0 %v890
          %v995 = vpop.f32.mrf.mxu0
          %v996 = vadd.f32 0.0, %v995
          %v997 = vpop.f32.mrf.mxu0
          %v998 = vpop.f32.mrf.mxu0
          %v999 = vadd.f32 0.0, %v998
          %v1000 = vpop.f32.mrf.mxu0
          %1001 = vmatprep.mubr.bf16.mxu0 0
          %1002 = vmatmul.mubr.bf16.gmra.mxu0 %v891
          %v1003 = vpop.f32.mrf.mxu0
          %v1004 = vadd.f32 0.0, %v1003
          %v1005 = vpop.f32.mrf.mxu0
          %v1006 = vpop.f32.mrf.mxu0
          %v1007 = vadd.f32 0.0, %v1006
          %v1008 = vpop.f32.mrf.mxu0
          %1009 = vmatprep.mubr.bf16.mxu0 0
          %1010 = vmatmul.mubr.bf16.gmra.mxu0 %v892
          %v1011 = vpop.f32.mrf.mxu0
          %v1012 = vadd.f32 0.0, %v1011
          %v1013 = vpop.f32.mrf.mxu0
          %v1014 = vpop.f32.mrf.mxu0
          %v1015 = vadd.f32 0.0, %v1014
          %v1016 = vpop.f32.mrf.mxu0
          %1017 = vmatprep.mubr.bf16.mxu0 0
          %1018 = vmatmul.mubr.bf16.gmra.mxu0 %v893
          %v1019 = vpop.f32.mrf.mxu0
          %v1020 = vadd.f32 0.0, %v1019
          %v1021 = vpop.f32.mrf.mxu0
          %v1022 = vpop.f32.mrf.mxu0
          %v1023 = vadd.f32 0.0, %v1022
          %v1024 = vpop.f32.mrf.mxu0
          %1025 = vmatprep.mubr.bf16.mxu0 0
          %1026 = vmatmul.mubr.bf16.gmra.mxu0 %v894
          %v1027 = vpop.f32.mrf.mxu0
          %v1028 = vadd.f32 0.0, %v1027
          %v1029 = vpop.f32.mrf.mxu0
          %v1030 = vpop.f32.mrf.mxu0
          %v1031 = vadd.f32 0.0, %v1030
          %v1032 = vpop.f32.mrf.mxu0
          %1033 = vmatprep.mubr.bf16.mxu0 0
          %1034 = vmatmul.mubr.bf16.gmra.mxu0 %v895
          %v1035 = vpop.f32.mrf.mxu0
          %v1036 = vadd.f32 0.0, %v1035
          %v1037 = vpop.f32.mrf.mxu0
          %v1038 = vpop.f32.mrf.mxu0
          %v1039 = vadd.f32 0.0, %v1038
          %v1040 = vpop.f32.mrf.mxu0
          %1041 = vmatprep.mubr.bf16.mxu0 0
          %1042 = vmatmul.mubr.bf16.gmra.mxu0 %v896
          %v1043 = vpop.f32.mrf.mxu0
          %v1044 = vadd.f32 0.0, %v1043
          %v1045 = vpop.f32.mrf.mxu0
          %v1046 = vpop.f32.mrf.mxu0
          %v1047 = vadd.f32 0.0, %v1046
          %v1048 = vpop.f32.mrf.mxu0
          %1049 = vdwg.mxu0
          %v1050 = vpack.c.bf16 %v991, %v988
          %v1051 = vpack.c.bf16 %v999, %v996
          %v1052 = vpack.c.bf16 %v1007, %v1004
          %v1053 = vpack.c.bf16 %v1015, %v1012
          %v1054 = vpack.c.bf16 %v1023, %v1020
          %v1055 = vpack.c.bf16 %v1031, %v1028
          %v1056 = vpack.c.bf16 %v1039, %v1036
          %v1057 = vpack.c.bf16 %v1047, %v1044
          %v1058 = vld [vmem:[#allocation9] sm:$0xf]
          %v1059 = vld [vmem:[#allocation9 + $0x4] sm:$0xf]
          %v1060 = vld [vmem:[#allocation9 + $0x8] sm:$0xf]
          %v1061 = vld [vmem:[#allocation9 + $0xc] sm:$0xf]
          %v1062 = vld [vmem:[#allocation9 + $0x10] sm:$0xf]
          %v1063 = vld [vmem:[#allocation9 + $0x14] sm:$0xf]
          %v1064 = vld [vmem:[#allocation9 + $0x18] sm:$0xf]
          %v1065 = vld [vmem:[#allocation9 + $0x1c] sm:$0xf]
          %v1066 = vld [vmem:[#allocation9 + $0x20] sm:$0xf]
          %v1067 = vld [vmem:[#allocation9 + $0x24] sm:$0xf]
          %v1068 = vld [vmem:[#allocation9 + $0x28] sm:$0xf]
          %v1069 = vld [vmem:[#allocation9 + $0x2c] sm:$0xf]
          %v1070 = vld [vmem:[#allocation9 + $0x30] sm:$0xf]
          %v1071 = vld [vmem:[#allocation9 + $0x34] sm:$0xf]
          %v1072 = vld [vmem:[#allocation9 + $0x38] sm:$0xf]
          %v1073 = vld [vmem:[#allocation9 + $0x3c] sm:$0xf]
          %v1074 = vld [vmem:[%s5] sm:$0x1]
          %v1076 = vlaneseq
          %v1077 = vshrl.u32 %v1076, 7
          %v1078 = vsub.s32 0, %v1077
          %v1079 = vrot.slane %v1074, %v1078
          %v1097 = vunpack.c.l.b16 %v1058
          %v1098 = vunpack.c.l.b16 %v1059
          %v1099 = vunpack.c.l.b16 %v1060
          %v1100 = vunpack.c.l.b16 %v1061
          %v1101 = vunpack.c.l.b16 %v1062
          %v1102 = vunpack.c.l.b16 %v1063
          %v1103 = vunpack.c.l.b16 %v1064
          %v1104 = vunpack.c.l.b16 %v1065
          %v1105 = vunpack.c.l.b16 %v1066
          %v1106 = vunpack.c.l.b16 %v1067
          %v1107 = vunpack.c.l.b16 %v1068
          %v1108 = vunpack.c.l.b16 %v1069
          %v1109 = vunpack.c.l.b16 %v1070
          %v1110 = vunpack.c.l.b16 %v1071
          %v1111 = vunpack.c.l.b16 %v1072
          %v1112 = vunpack.c.l.b16 %v1073
          %v1113 = vpack.c.b16 %v1098, %v1097
          %v1114 = vpack.c.b16 %v1100, %v1099
          %v1115 = vpack.c.b16 %v1102, %v1101
          %v1116 = vpack.c.b16 %v1104, %v1103
          %v1117 = vpack.c.b16 %v1106, %v1105
          %v1118 = vpack.c.b16 %v1108, %v1107
          %v1119 = vpack.c.b16 %v1110, %v1109
          %v1120 = vpack.c.b16 %v1112, %v1111
          %1129 = vmatprep.subr.bf16.mxu0 0
          %1130 = vmatpush1.bf16.msra.mxu0 %v1120
          %1131 = vmatprep.subr.bf16.mxu0 0
          %1132 = vmatpush1.bf16.msra.mxu0 %v1119
          %1133 = vmatprep.subr.bf16.mxu0 0
          %1134 = vmatpush1.bf16.msra.mxu0 %v1118
          %1135 = vmatprep.subr.bf16.mxu0 0
          %1136 = vmatpush1.bf16.msra.mxu0 %v1117
          %1137 = vmatprep.subr.bf16.mxu0 0
          %1138 = vmatpush1.bf16.msra.mxu0 %v1116
          %1139 = vmatprep.subr.bf16.mxu0 0
          %1140 = vmatpush1.bf16.msra.mxu0 %v1115
          %1141 = vmatprep.subr.bf16.mxu0 0
          %1142 = vmatpush1.bf16.msra.mxu0 %v1114
          %1143 = vmatprep.subr.bf16.mxu0 0
          %1144 = vmatpush1.bf16.msra.mxu0 %v1113
          %1145 = vmatprep.subr.bf16.mxu0 0
          %1146 = vmatpush2.bf16.msra.mxu0 0
          %1147 = vmatprep.subr.bf16.mxu0 0
          %1148 = vmatpush2.bf16.msra.mxu0 0
          %1149 = vmatprep.subr.bf16.mxu0 0
          %1150 = vmatpush2.bf16.msra.mxu0 0
          %1151 = vmatprep.subr.bf16.mxu0 0
          %1152 = vmatpush2.bf16.msra.mxu0 0
          %1153 = vmatprep.subr.bf16.mxu0 0
          %1154 = vmatpush2.bf16.msra.mxu0 0
          %1155 = vmatprep.subr.bf16.mxu0 0
          %1156 = vmatpush2.bf16.msra.mxu0 0
          %1157 = vmatprep.subr.bf16.mxu0 0
          %1158 = vmatpush2.bf16.msra.mxu0 0
          %1159 = vmatprep.subr.bf16.mxu0 0
          %1160 = vmatpush2.bf16.msra.mxu0 0
          %1161 = vmatprep.mubr.bf16.mxu0 0
          %1162 = vmatmul.mubr.bf16.gmra.mxu0 %v1050
          %v1163 = vpop.f32.mrf.mxu0
          %v1164 = vadd.f32 %v1079, %v1163
          %v1165 = vpop.f32.mrf.mxu0
          %v1166 = vpop.f32.mrf.mxu0
          %v1167 = vadd.f32 %v1079, %v1166
          %v1168 = vpop.f32.mrf.mxu0
          %1169 = vmatprep.mubr.bf16.mxu0 0
          %1170 = vmatmul.mubr.bf16.gmra.mxu0 %v1051
          %v1171 = vpop.f32.mrf.mxu0
          %v1172 = vadd.f32 %v1079, %v1171
          %v1173 = vpop.f32.mrf.mxu0
          %v1174 = vpop.f32.mrf.mxu0
          %v1175 = vadd.f32 %v1079, %v1174
          %v1176 = vpop.f32.mrf.mxu0
          %1177 = vmatprep.mubr.bf16.mxu0 0
          %1178 = vmatmul.mubr.bf16.gmra.mxu0 %v1052
          %v1179 = vpop.f32.mrf.mxu0
          %v1180 = vadd.f32 %v1079, %v1179
          %v1181 = vpop.f32.mrf.mxu0
          %v1182 = vpop.f32.mrf.mxu0
          %v1183 = vadd.f32 %v1079, %v1182
          %v1184 = vpop.f32.mrf.mxu0
          %1185 = vmatprep.mubr.bf16.mxu0 0
          %1186 = vmatmul.mubr.bf16.gmra.mxu0 %v1053
          %v1187 = vpop.f32.mrf.mxu0
          %v1188 = vadd.f32 %v1079, %v1187
          %v1189 = vpop.f32.mrf.mxu0
          %v1190 = vpop.f32.mrf.mxu0
          %v1191 = vadd.f32 %v1079, %v1190
          %v1192 = vpop.f32.mrf.mxu0
          %1193 = vmatprep.mubr.bf16.mxu0 0
          %1194 = vmatmul.mubr.bf16.gmra.mxu0 %v1054
          %v1195 = vpop.f32.mrf.mxu0
          %v1196 = vadd.f32 %v1079, %v1195
          %v1197 = vpop.f32.mrf.mxu0
          %v1198 = vpop.f32.mrf.mxu0
          %v1199 = vadd.f32 %v1079, %v1198
          %v1200 = vpop.f32.mrf.mxu0
          %1201 = vmatprep.mubr.bf16.mxu0 0
          %1202 = vmatmul.mubr.bf16.gmra.mxu0 %v1055
          %v1203 = vpop.f32.mrf.mxu0
          %v1204 = vadd.f32 %v1079, %v1203
          %v1205 = vpop.f32.mrf.mxu0
          %v1206 = vpop.f32.mrf.mxu0
          %v1207 = vadd.f32 %v1079, %v1206
          %v1208 = vpop.f32.mrf.mxu0
          %1209 = vmatprep.mubr.bf16.mxu0 0
          %1210 = vmatmul.mubr.bf16.gmra.mxu0 %v1056
          %v1211 = vpop.f32.mrf.mxu0
          %v1212 = vadd.f32 %v1079, %v1211
          %v1213 = vpop.f32.mrf.mxu0
          %v1214 = vpop.f32.mrf.mxu0
          %v1215 = vadd.f32 %v1079, %v1214
          %v1216 = vpop.f32.mrf.mxu0
          %1217 = vmatprep.mubr.bf16.mxu0 0
          %1218 = vmatmul.mubr.bf16.gmra.mxu0 %v1057
          %v1219 = vpop.f32.mrf.mxu0
          %v1220 = vadd.f32 %v1079, %v1219
          %v1221 = vpop.f32.mrf.mxu0
          %v1222 = vpop.f32.mrf.mxu0
          %v1223 = vadd.f32 %v1079, %v1222
          %v1224 = vpop.f32.mrf.mxu0
          %1225 = vdwg.mxu0
          %v1226 = vpack.c.bf16 %v1167, %v1164
          %v1227 = vpack.c.bf16 %v1175, %v1172
          %v1228 = vpack.c.bf16 %v1183, %v1180
          %v1229 = vpack.c.bf16 %v1191, %v1188
          %v1230 = vpack.c.bf16 %v1199, %v1196
          %v1231 = vpack.c.bf16 %v1207, %v1204
          %v1232 = vpack.c.bf16 %v1215, %v1212
          %v1233 = vpack.c.bf16 %v1223, %v1220
          %v1242 = vunpack.c.l.b16 %v1226
          %v1243 = vunpack.c.h.b16 %v1226
          %v1244 = vunpack.c.l.b16 %v1227
          %v1245 = vunpack.c.h.b16 %v1227
          %v1246 = vunpack.c.l.b16 %v1228
          %v1247 = vunpack.c.h.b16 %v1228
          %v1248 = vunpack.c.l.b16 %v1229
          %v1249 = vunpack.c.h.b16 %v1229
          %v1250 = vunpack.c.l.b16 %v1230
          %v1251 = vunpack.c.h.b16 %v1230
          %v1252 = vunpack.c.l.b16 %v1231
          %v1253 = vunpack.c.h.b16 %v1231
          %v1254 = vunpack.c.l.b16 %v1232
          %v1255 = vunpack.c.h.b16 %v1232
          %v1256 = vunpack.c.l.b16 %v1233
          %v1257 = vunpack.c.h.b16 %v1233
          %v1258 = vpack.c.b16 %v1242, %v1242
          %v1259 = vpack.c.b16 %v1243, %v1243
          %v1260 = vpack.c.b16 %v1244, %v1244
          %v1261 = vpack.c.b16 %v1245, %v1245
          %v1262 = vpack.c.b16 %v1246, %v1246
          %v1263 = vpack.c.b16 %v1247, %v1247
          %v1264 = vpack.c.b16 %v1248, %v1248
          %v1265 = vpack.c.b16 %v1249, %v1249
          %v1266 = vpack.c.b16 %v1250, %v1250
          %v1267 = vpack.c.b16 %v1251, %v1251
          %v1268 = vpack.c.b16 %v1252, %v1252
          %v1269 = vpack.c.b16 %v1253, %v1253
          %v1270 = vpack.c.b16 %v1254, %v1254
          %v1271 = vpack.c.b16 %v1255, %v1255
          %v1272 = vpack.c.b16 %v1256, %v1256
          %v1273 = vpack.c.b16 %v1257, %v1257
          %1290 = vst [vmem:[%s310] sm:$0xf] %v1258
          %1291 = vst [vmem:[%s310 + $0x4] sm:$0xf] %v1259
          %1292 = vst [vmem:[%s310 + $0x8] sm:$0xf] %v1260
          %1293 = vst [vmem:[%s310 + $0xc] sm:$0xf] %v1261
          %1294 = vst [vmem:[%s310 + $0x10] sm:$0xf] %v1262
          %1295 = vst [vmem:[%s310 + $0x14] sm:$0xf] %v1263
          %1296 = vst [vmem:[%s310 + $0x18] sm:$0xf] %v1264
          %1297 = vst [vmem:[%s310 + $0x1c] sm:$0xf] %v1265
          %1298 = vst [vmem:[%s310 + $0x20] sm:$0xf] %v1266
          %1299 = vst [vmem:[%s310 + $0x24] sm:$0xf] %v1267
          %1300 = vst [vmem:[%s310 + $0x28] sm:$0xf] %v1268
          %1301 = vst [vmem:[%s310 + $0x2c] sm:$0xf] %v1269
          %1302 = vst [vmem:[%s310 + $0x30] sm:$0xf] %v1270
          %1303 = vst [vmem:[%s310 + $0x34] sm:$0xf] %v1271
          %1304 = vst [vmem:[%s310 + $0x38] sm:$0xf] %v1272
          %1305 = vst [vmem:[%s310 + $0x3c] sm:$0xf] %v1273
        $region68: #{tpu_custom_call.1} parent=43 // pred_fallthru
          _
        %s1306 = sand.u32 %s176, 1
        %s1307 = scalar_lea.sflag [#allocation5], %s1306
        %s1308 = sand.u32 %s176, 1
        %s1309 = smul.addr %s1308, 64
        %s1310 = scalar_lea.vmem [#allocation11], %s1309
        // Predicated region
        $region69: #{tpu_custom_call.1} parent=43 // pred_check
          %p1311 = pneg %p186
        $region70: #{tpu_custom_call.1} parent=43 // pred_check_branch
          %1313 = sbr.rel (%p1311) target = $region72
        $region71: #{tpu_custom_call.1} parent=43 // pred_region
          %s1314 = smul.u32 %s28, %s27
          %s1315 = smul.u32 16, %s1314
          %s1317 = ssub.s32 1024, 1024
          %1318 = vsyncadd %s1307, %s1317
          %s1319 = smul.addr %s1315, 64
          %s1320 = scalar_lea.hbm %s6, %s1319
          %s1321 = sshll.u32 %s1310, 4
          %s1322 = int_to_ptr.vmem [resolvable:$true] %s1321
          %1327 = dma.vmem_to_hbm [thread:$0]  %s1322, 1024, %s1320, %s1307, 64, 64, 4
        $region72: #{tpu_custom_call.1} parent=43 // pred_fallthru
          _
      $region44: #{tpu_custom_call.1} parent=5 // pred_fallthru
        _
      %p1328 = scmp.le.s32.totalorder 2, %s18
      // Predicated region
      $region73: #{tpu_custom_call.1} parent=5 // pred_check
        %p1329 = pneg %p1328
      $region74: #{tpu_custom_call.1} parent=5 // pred_check_branch
        %1331 = sbr.rel (%p1329) target = $region76
      $region75: #{tpu_custom_call.1} parent=5 // pred_region
        %s1332 = ssub.s32 %s18, 2
        // Predicated region
        $region77: #{tpu_custom_call.1} parent=75 // pred_check
          %p1333 = pneg %p192
        $region78: #{tpu_custom_call.1} parent=75 // pred_check_branch
          %1335 = sbr.rel (%p1333) target = $region80
        $region79: #{tpu_custom_call.1} parent=75 // pred_region
          %s1336 = sand.u32 %s177, 1
          %s1337 = scalar_lea.sflag [#allocation5], %s1336
          %s1338 = sand.u32 %s177, 1
          %s1339 = smul.addr %s1338, 64
          %s1340 = scalar_lea.vmem [#allocation11], %s1339
          %1341 = dma.done %s1337, 1024
        $region80: #{tpu_custom_call.1} parent=75 // pred_fallthru
          _
      $region76: #{tpu_custom_call.1} parent=5 // pred_fallthru
        _
    $region6: #{tpu_custom_call.1} parent=1 // loop_footer
      %s22 = sadd.s32 1, %s18
    $region7: #{tpu_custom_call.1} parent=1 // loop_footer_branch
      %17 = sbr.rel target = $region3
    $region8: #{tpu_custom_call.1} parent=1 // loop_exit
      _
    %1342 = vsyncpa [#allocation4], 1
    %s1343 = scalar_lea.sflag [#allocation4], 1
    %1344 = vsyncpa %s1343, 1
    %1345 = vsyncpa [#allocation7], 1
    %1346 = vsyncpa [#allocation10], 1
    %1347 = vsyncpa [#allocation5], 1
    %s1348 = scalar_lea.sflag [#allocation5], 1
    %1349 = vsyncpa %s1348, 1

</llo_original>
